<compile_context>
chip_gen: v7x
topology: tpu7x:2x2x1
jax: 0.10.0
libtpu: 0.0.40
codegen_flags: <defaults>
</compile_context>

<pallas_src>
import numpy as np
import jax
import jax.numpy as jnp
from jax.experimental import pallas as pl
from jax.experimental.pallas import tpu as pltpu

KH = KW = 4                      # ConvTranspose2d kernel size (stride 2, padding 1)
COMPUTE_DTYPE = jnp.bfloat16     # MXU operand dtype (accumulation is f32)


def upconv_kernel(x_ref, skip_ref, w_ref, scale_ref, bias_ref, o_ref):
    """One fused step over a lane tile of N*H*W slab positions.

    x_ref:     [9*Cin, TL]      bf16 im2col columns (one column per (n, y, x) position)
    skip_ref:  [4*Cout, TL]     f32 phase-major skip slab
    w_ref:     [4*Cout, 9*Cin]  bf16 tap matrix (phase-major rows, shift-major cols)
    scale_ref: [4*Cout, 1]      BN scale = gamma/sqrt(var+eps), tiled per phase
    bias_ref:  [4*Cout, 1]      BN bias + conv_bias*scale, tiled per phase
    o_ref:     [4*Cout, TL]     f32 output slab tile
    """
    # Single K=9*Cin matmul; f32 accumulate lives in the MXU result path.
    acc = jnp.dot(w_ref[...], x_ref[...], preferred_element_type=jnp.float32)
    # Fused skip add + BatchNorm (eval, folded) + ReLU.
    y = (acc + skip_ref[...]) * scale_ref[...] + bias_ref[...]
    o_ref[...] = jnp.maximum(y, 0.0).astype(o_ref.dtype)


def build_tap_matrix(w_t, Cin, Cout):
    """w_t: [Cin, Cout, 4, 4] (PyTorch ConvTranspose2d layout) -> W_all[4*Cout, 9*Cin].

    For output phase (ry, rx) and padded-input shift (dy, dx):
      W_all[(2*ry+rx)*Cout + co, (3*dy+dx)*Cin + ci] = w_t[ci, co, ky, kx]
    with ky = 3 + ry - 2*dy, kx = 3 + rx - 2*dx (zero when the tap falls outside 4x4).
    Pure jnp so it is traceable under jit.
    """
    phase_rows = []
    for ry in range(2):
        for rx in range(2):
            shift_blocks = []
            for dy in range(3):
                ky = 3 + ry - 2 * dy
                for dx in range(3):
                    kx = 3 + rx - 2 * dx
                    if 0 <= ky < KH and 0 <= kx < KW:
                        blk = w_t[:, :, ky, kx].T                     # [Cout, Cin]
                    else:
                        blk = jnp.zeros((Cout, Cin), w_t.dtype)
                    shift_blocks.append(blk)
            phase_rows.append(jnp.concatenate(shift_blocks, axis=1))  # [Cout, 9*Cin]
    return jnp.concatenate(phase_rows, axis=0)                        # [4*Cout, 9*Cin]


def _lane_tiling(total, max_tile_lanes=2048):
    """Pick a lane tile (multiple of 128): fat steps, but >=2 grid steps when possible
    (v7x has 2 TensorCores; on v5e/v6e two fat steps are still fine)."""
    n128 = max(1, -(-total // 128))
    tile128 = min(n128, max_tile_lanes // 128)
    if n128 >= 2:
        tile128 = min(tile128, -(-n128 // 2))   # at least two grid steps
    tl = tile128 * 128
    steps = -(-total // tl)
    return tl, steps


def upconv_forward(x, skip, w_t, conv_bias, bn_scale, bn_bias):
    """x: [N,Cin,H,W]; skip: [N,Cout,2H,2W]; w_t: [Cin,Cout,4,4] (PyTorch layout).
       Returns relu(bn(conv_transpose2d(x) + skip)) as [N, Cout, 2H, 2W] (f32)."""
    N, Cin, H, W = x.shape
    Cout = w_t.shape[1]
    HW = H * W
    NT = N * HW                              # lane length of all compute slabs
    TL, steps = _lane_tiling(NT)
    NTp = TL * steps                         # lane-padded total (multiple of 128)

    # ---- wrapper-side im2col of x (tiny: 9*Cin rows) -> X9[9*Cin, N*H*W], bf16 ----
    xp = jnp.pad(x, ((0, 0), (0, 0), (1, 1), (1, 1)))                     # [N, Cin, H+2, W+2]
    windows = jnp.stack([xp[:, :, dy:dy + H, dx:dx + W]
                         for dy in range(3) for dx in range(3)], axis=0)  # [9, N, Cin, H, W]
    x9 = windows.transpose(0, 2, 1, 3, 4).reshape(9 * Cin, NT).astype(COMPUTE_DTYPE)
    x9 = jnp.pad(x9, ((0, 0), (0, NTp - NT)))

    # ---- skip -> phase-major, lane-dense slab [4*Cout, N*H*W] (layout plumbing) ----
    skip_slab = skip.reshape(N, Cout, H, 2, W, 2).transpose(3, 5, 1, 0, 2, 4)
    skip_slab = skip_slab.reshape(4 * Cout, NT).astype(jnp.float32)
    skip_slab = jnp.pad(skip_slab, ((0, 0), (0, NTp - NT)))

    # ---- parameters: tap matrix + folded BN scale / (BN bias + conv bias * scale) ----
    w_all = build_tap_matrix(w_t, Cin, Cout).astype(COMPUTE_DTYPE)
    scale_slab = jnp.tile(bn_scale.astype(jnp.float32), 4).reshape(4 * Cout, 1)
    bias_slab = jnp.tile((bn_bias + conv_bias * bn_scale).astype(jnp.float32),
                         4).reshape(4 * Cout, 1)

    cost = pl.CostEstimate(
        flops=2 * (4 * Cout) * (9 * Cin) * NTp + 4 * (4 * Cout) * NTp,
        transcendentals=0,
        bytes_accessed=int(x9.size * x9.dtype.itemsize
                           + skip_slab.size * 4
                           + w_all.size * w_all.dtype.itemsize
                           + scale_slab.size * 4 + bias_slab.size * 4
                           + (4 * Cout) * NTp * 4),
    )

    out_slab = pl.pallas_call(
        upconv_kernel,
        out_shape=jax.ShapeDtypeStruct((4 * Cout, NTp), jnp.float32),
        grid_spec=pltpu.PrefetchScalarGridSpec(
            num_scalar_prefetch=0,
            grid=(steps,),
            in_specs=[
                pl.BlockSpec((9 * Cin, TL), lambda t: (0, t)),
                pl.BlockSpec((4 * Cout, TL), lambda t: (0, t)),
                pl.BlockSpec((4 * Cout, 9 * Cin), lambda t: (0, 0)),
                pl.BlockSpec((4 * Cout, 1), lambda t: (0, 0)),
                pl.BlockSpec((4 * Cout, 1), lambda t: (0, 0)),
            ],
            out_specs=pl.BlockSpec((4 * Cout, TL), lambda t: (0, t)),
        ),
        compiler_params=pltpu.CompilerParams(
            dimension_semantics=("parallel",)),
        cost_estimate=cost,
    )(x9, skip_slab, w_all, scale_slab, bias_slab)

    # ---- phase slab -> NCHW [N, Cout, 2H, 2W] ----
    out = out_slab[:, :NT].reshape(2, 2, Cout, N, H, W)       # (ry, rx, co, n, y, x)
    out = out.transpose(3, 2, 4, 0, 5, 1).reshape(N, Cout, 2 * H, 2 * W)
    return out


def reference_upconv(x, skip, w_t, conv_bias, bn_scale, bn_bias):
    """Pure-JAX reference: explicit scatter-add form of ConvTranspose2d(k=4, s=2, p=1)."""
    N, Cin, H, W = x.shape
    Cout = w_t.shape[1]
    buf = jnp.zeros((N, Cout, 2 * H + 2, 2 * W + 2), jnp.float32)
    for ky in range(KH):
        for kx in range(KW):
            contrib = jnp.einsum('nihw,io->nohw', x, w_t[:, :, ky, kx])
            buf = buf.at[:, :, ky:ky + 2 * H:2, kx:kx + 2 * W:2].add(contrib)
    conv = buf[:, :, 1:2 * H + 1, 1:2 * W + 1] + conv_bias[None, :, None, None]
    y = (conv + skip) * bn_scale[None, :, None, None] + bn_bias[None, :, None, None]
    return jnp.maximum(y, 0.0)


if __name__ == "__main__":
    key = jax.random.PRNGKey(0)
    N, Cin, Cout, H, W = 2, 4, 8, 16, 16
    ks = jax.random.split(key, 8)

    x = jax.random.normal(ks[0], (N, Cin, H, W), dtype=jnp.float32)
    skip = jax.random.normal(ks[1], (N, Cout, 2 * H, 2 * W), dtype=jnp.float32)

    # nn.ConvTranspose2d(Cin, Cout, 4, stride=2, padding=1) parameters (PyTorch layout).
    w_t = 0.2 * jax.random.normal(ks[2], (Cin, Cout, KH, KW), dtype=jnp.float32)
    conv_bias = 0.1 * jax.random.normal(ks[3], (Cout,), dtype=jnp.float32)

    # nn.BatchNorm2d(Cout) in eval mode, folded to scale/bias.
    gamma = 1.0 + 0.1 * jax.random.normal(ks[4], (Cout,), dtype=jnp.float32)
    beta = 0.1 * jax.random.normal(ks[5], (Cout,), dtype=jnp.float32)
    run_mean = 0.1 * jax.random.normal(ks[6], (Cout,), dtype=jnp.float32)
    run_var = jnp.abs(jax.random.normal(ks[7], (Cout,), dtype=jnp.float32)) + 0.5
    eps = 1e-5
    bn_scale = gamma / jnp.sqrt(run_var + eps)
    bn_bias = beta - run_mean * bn_scale

    fwd = jax.jit(upconv_forward)
    out = jax.block_until_ready(fwd(x, skip, w_t, conv_bias, bn_scale, bn_bias))
    ref = jax.block_until_ready(reference_upconv(x, skip, w_t, conv_bias, bn_scale, bn_bias))

    # bf16 MXU operands -> looser tolerance vs. the f32 reference (per review note).
    np.testing.assert_allclose(np.asarray(out), np.asarray(ref), rtol=2e-2, atol=2e-2)

    print("KERNEL_OK")
</pallas_src>

<mosaic_0001>
module attributes {stable_mosaic.version = 11 : i64} {
  func.func @upconv_kernel(%arg0: i32, %arg1: memref<36x256xbf16, #tpu.memory_space<vmem>>, %arg2: memref<32x256xf32, #tpu.memory_space<vmem>>, %arg3: memref<32x36xbf16, #tpu.memory_space<vmem>>, %arg4: memref<32x1xf32, #tpu.memory_space<vmem>>, %arg5: memref<32x1xf32, #tpu.memory_space<vmem>>, %arg6: memref<32x256xf32, #tpu.memory_space<vmem>>) attributes {dimension_semantics = [#tpu.dimension_semantics<parallel>], iteration_bounds = array<i64: 2>, scalar_prefetch = 0 : i64, scratch_operands = 0 : i64, tpu.core_type = #tpu.core_type<tc>, window_params = [{transform_indices = @transform_0, window_bounds = array<i64: 36, 256>}, {transform_indices = @transform_1, window_bounds = array<i64: 32, 256>}, {pipeline_mode = #tpu.pipeline_mode<synchronous>, transform_indices = @transform_2, window_bounds = array<i64: 32, 36>}, {pipeline_mode = #tpu.pipeline_mode<synchronous>, transform_indices = @transform_3, window_bounds = array<i64: 32, 1>}, {pipeline_mode = #tpu.pipeline_mode<synchronous>, transform_indices = @transform_4, window_bounds = array<i64: 32, 1>}, {transform_indices = @transform_5, window_bounds = array<i64: 32, 256>}]} {
    %c0 = arith.constant 0 : index
    %c0_0 = arith.constant 0 : index
    %0 = vector.load %arg3[%c0, %c0_0] : memref<32x36xbf16, #tpu.memory_space<vmem>>, vector<32x36xbf16>
    %c0_1 = arith.constant 0 : index
    %c0_2 = arith.constant 0 : index
    %1 = vector.load %arg1[%c0_1, %c0_2] : memref<36x256xbf16, #tpu.memory_space<vmem>>, vector<36x256xbf16>
    %cst = arith.constant dense<0.000000e+00> : vector<32x256xf32>
    %2 = tpu.matmul %0, %1, %cst {dimension_numbers = #tpu.dot_dimension_numbers<[1], [0], [0], [1], [0, 0, 1, 1], [], []>} : vector<32x36xbf16>, vector<36x256xbf16>, vector<32x256xf32> -> vector<32x256xf32>
    %c0_3 = arith.constant 0 : index
    %c0_4 = arith.constant 0 : index
    %3 = vector.load %arg2[%c0_3, %c0_4] : memref<32x256xf32, #tpu.memory_space<vmem>>, vector<32x256xf32>
    %4 = arith.addf %2, %3 : vector<32x256xf32>
    %c0_5 = arith.constant 0 : index
    %c0_6 = arith.constant 0 : index
    %5 = vector.load %arg4[%c0_5, %c0_6] : memref<32x1xf32, #tpu.memory_space<vmem>>, vector<32x1xf32>
    %6 = vector.broadcast %5 : vector<32x1xf32> to vector<32x256xf32>
    %7 = arith.mulf %4, %6 : vector<32x256xf32>
    %c0_7 = arith.constant 0 : index
    %c0_8 = arith.constant 0 : index
    %8 = vector.load %arg5[%c0_7, %c0_8] : memref<32x1xf32, #tpu.memory_space<vmem>>, vector<32x1xf32>
    %9 = vector.broadcast %8 : vector<32x1xf32> to vector<32x256xf32>
    %10 = arith.addf %7, %9 : vector<32x256xf32>
    %cst_9 = arith.constant 0.000000e+00 : f32
    %11 = vector.broadcast %cst_9 : f32 to vector<32x256xf32>
    %12 = arith.maximumf %10, %11 : vector<32x256xf32>
    %c0_10 = arith.constant 0 : index
    %c0_11 = arith.constant 0 : index
    %13 = vector.load %arg6[%c0_10, %c0_11] : memref<32x256xf32, #tpu.memory_space<vmem>>, vector<32x256xf32>
    tpu.vector_store %arg6[%c0_10, %c0_11], %12 {strides = array<i32>} : memref<32x256xf32, #tpu.memory_space<vmem>>, vector<32x256xf32>,
    return
  }
  func.func @transform_0(%arg0: i32) -> (i32, i32) {
    %c0_i32 = arith.constant 0 : i32
    %c0_i32_0 = arith.constant 0 : i32
    return %c0_i32, %arg0 : i32, i32
  }
  func.func @transform_1(%arg0: i32) -> (i32, i32) {
    %c0_i32 = arith.constant 0 : i32
    %c0_i32_0 = arith.constant 0 : i32
    return %c0_i32, %arg0 : i32, i32
  }
  func.func @transform_2(%arg0: i32) -> (i32, i32) {
    %c0_i32 = arith.constant 0 : i32
    %c0_i32_0 = arith.constant 0 : i32
    %c0_i32_1 = arith.constant 0 : i32
    return %c0_i32, %c0_i32_0 : i32, i32
  }
  func.func @transform_3(%arg0: i32) -> (i32, i32) {
    %c0_i32 = arith.constant 0 : i32
    %c0_i32_0 = arith.constant 0 : i32
    %c0_i32_1 = arith.constant 0 : i32
    return %c0_i32, %c0_i32_0 : i32, i32
  }
  func.func @transform_4(%arg0: i32) -> (i32, i32) {
    %c0_i32 = arith.constant 0 : i32
    %c0_i32_0 = arith.constant 0 : i32
    %c0_i32_1 = arith.constant 0 : i32
    return %c0_i32, %c0_i32_0 : i32, i32
  }
  func.func @transform_5(%arg0: i32) -> (i32, i32) {
    %c0_i32 = arith.constant 0 : i32
    %c0_i32_0 = arith.constant 0 : i32
    return %c0_i32, %arg0 : i32, i32
  }
}

</mosaic_0001>

<llo_original>
// kernel: tile.13
$region0: #{tile.13}
  #allocation0 [shape = 's32[1]{0}', space=sflag, size = 0x4, scoped, tag = 'scoped memory for tile.13']
  %s0 = inlined_call_operand.vmem [shape: f32[8], index: 0, kind: input, shape index: {}]
  %s1 = inlined_call_operand.vmem [shape: f32[4,8], index: 1, kind: output, shape index: {}]
  // Predicated region
  $region2: #{tile.13} parent=0 // pred_check
    _
  $region3: #{tile.13} parent=0 // pred_check_branch
    %3 = sbr.rel (0) target = $region5
  $region4: #{tile.13} parent=0 // pred_region
    _
  $region5: #{tile.13} parent=0 // pred_fallthru
    _
  %v4 = vld [vmem:[%s0] ss:$0 sm:$0xff]
  %5 = vst [vmem:[%s1] sm:$0xf] %v4

// kernel: tile.0
$region0: #{tile.0}
  %s0 = inlined_call_operand.vmem [shape: f32[4,8], index: 0, kind: input, shape index: {}]
  %s1 = inlined_call_operand.vmem [shape: f32[32,1], index: 1, kind: output, shape index: {}]
  $region1: #{tile.0} parent=0
    #allocation0 [shape = 'u8[4096]{0}', space=vmem, size = 0x1000, scoped, tag = 'scoped mem for input reshape']
    %s3 = sshllo.u32 0, 4
    %v4 = vld [vmem:[%s0] sm:%s3]
    %5 = vst [vmem:[#allocation0] sm:%s3] %v4
    %v6 = vld [vmem:[#allocation0] sm:$0xf]
    %vm7 = vcmask 7168
    %8 = vst.msk [vmem:[%s1] ss:$8 sm:$0xf] %vm7, %v6
    %v9 = vld [vmem:[#allocation0] sm:$0xf]
    %10 = vrot.lane.b32.xlu0 %v9, 127
    %v11 = vpop.permute.xlu0 %10
    %vm12 = vcmask 7168
    %s13 = scalar_lea.vmem %s1, 1
    %14 = vst.msk [vmem:[%s13] ss:$8 sm:$0xf] %vm12, %v11
    %v15 = vld [vmem:[#allocation0] sm:$0xf]
    %16 = vrot.lane.b32.xlu0 %v15, 126
    %v17 = vpop.permute.xlu0 %16
    %vm18 = vcmask 7168
    %s19 = scalar_lea.vmem %s1, 2
    %20 = vst.msk [vmem:[%s19] ss:$8 sm:$0xf] %vm18, %v17
    %v21 = vld [vmem:[#allocation0] sm:$0xf]
    %22 = vrot.lane.b32.xlu0 %v21, 125
    %v23 = vpop.permute.xlu0 %22
    %vm24 = vcmask 7168
    %s25 = scalar_lea.vmem %s1, 3
    %26 = vst.msk [vmem:[%s25] ss:$8 sm:$0xf] %vm24, %v23
    %v27 = vld [vmem:[#allocation0] sm:$0xf]
    %28 = vrot.lane.b32.xlu0 %v27, 124
    %v29 = vpop.permute.xlu0 %28
    %vm30 = vcmask 7168
    %s31 = scalar_lea.vmem %s1, 4
    %32 = vst.msk [vmem:[%s31] ss:$8 sm:$0xf] %vm30, %v29
    %v33 = vld [vmem:[#allocation0] sm:$0xf]
    %34 = vrot.lane.b32.xlu0 %v33, 123
    %v35 = vpop.permute.xlu0 %34
    %vm36 = vcmask 7168
    %s37 = scalar_lea.vmem %s1, 5
    %38 = vst.msk [vmem:[%s37] ss:$8 sm:$0xf] %vm36, %v35
    %v39 = vld [vmem:[#allocation0] sm:$0xf]
    %40 = vrot.lane.b32.xlu0 %v39, 122
    %v41 = vpop.permute.xlu0 %40
    %vm42 = vcmask 7168
    %s43 = scalar_lea.vmem %s1, 6
    %44 = vst.msk [vmem:[%s43] ss:$8 sm:$0xf] %vm42, %v41
    %v45 = vld [vmem:[#allocation0] sm:$0xf]
    %46 = vrot.lane.b32.xlu0 %v45, 121
    %v47 = vpop.permute.xlu0 %46
    %vm48 = vcmask 7168
    %s49 = scalar_lea.vmem %s1, 7
    %50 = vst.msk [vmem:[%s49] ss:$8 sm:$0xf] %vm48, %v47

// kernel: upconv_forward.1
$region0: #{upconv_forward.1}
  #allocation0 [shape = 'u32[]', space=smem, size = 0x4, offset = 0x4, fixed_abs, tag = 'smem constant byte address 0x4 - core index']
  #allocation1 [shape = 'u32[144,128]{1,0:T(1,128)}', space=vmem, size = 0x12000, scoped, tag = 'internal scratch']
  %s0 = inlined_call_operand.vmem [shape: bf16[36,512], index: 0, kind: input, shape index: {}]
  %s1 = inlined_call_operand.vmem [shape: f32[32,512], index: 1, kind: input, shape index: {}]
  %s2 = inlined_call_operand.vmem [shape: bf16[32,36], index: 2, kind: input, shape index: {}]
  %s3 = inlined_call_operand.vmem [shape: f32[32,1], index: 3, kind: input, shape index: {}]
  %s4 = inlined_call_operand.vmem [shape: f32[32,1], index: 4, kind: input, shape index: {}]
  %s5 = inlined_call_operand.vmem [shape: f32[32,512], index: 5, kind: output, shape index: {}]
  %s6 = sld [smem:[#allocation0]]
  $region133: #{upconv_forward.1} parent=0
    _
  %s8 = ssub.s32 1, %s6
  %s9 = scalar_select 0, %s8, %s6
  $region1: #{upconv_forward.1} parent=0
    #allocation2 [shape = 'u8[40960]{0}', space=vmem, size = 0xa000, scoped, tag = 'input window, operand 0']
    #allocation3 [shape = 'u8[65536]{0}', space=vmem, size = 0x10000, scoped, tag = 'input window, operand 1']
    #allocation4 [shape = 'u8[65536]{0}', space=vmem, size = 0x10000, scoped, tag = 'output window, operand 0']
    loop: start=0, step=1, limit=4
    $region2: #{upconv_forward.1} parent=1 // loop_pre_header
      _
    $region3: #{upconv_forward.1} parent=1 // loop_header
      %s11 = sphi 0, %s15
      %p12 = scmp.ge.s32.totalorder %s11, 4
      %s21 = sphi 0, %s23
      %s24 = sphi 0, %s21
      %s25 = sphi 0, %s24
      %s41 = sphi 0, %s25
      %s47 = sphi 0, %s49
      %s50 = sphi 0, %s47
      %s51 = sphi 0, %s50
      %s67 = sphi 0, %s51
      %s71 = sphi 0, %s71
      %s73 = sphi 0, %s71
      %s74 = sphi 0, %s73
      %s88 = sphi 0, %s74
      %s92 = sphi 0, %s92
      %s94 = sphi 0, %s92
      %s95 = sphi 0, %s94
      %s109 = sphi 0, %s95
      %s113 = sphi 0, %s113
      %s115 = sphi 0, %s113
      %s116 = sphi 0, %s115
      %s130 = sphi 0, %s116
      %s136 = sphi 0, %s138
      %s139 = sphi 0, %s136
      %s140 = sphi 0, %s139
      %s156 = sphi 0, %s140
    $region4: #{upconv_forward.1} parent=1 // loop_header_branch
      %14 = sbr.rel (%p12) target = $region8
    $region5: #{upconv_forward.1} parent=1 // loop_body
      %s16 = ssub.s32 %s11, 1
      %s17 = ssub.s32 %s11, 2
      %s18 = sadd.s32 %s11, 1
      %s19 = ssub.s32 %s11, %s18
      %p20 = scmp.eq.s32.totalorder %s19, 0
      %s22 = sadd.s32 %s21, 1
      %s23 = scalar_select %p20, %s21, %s22
      %p26 = pneg %p20
      %p27 = scmp.eq.s32.totalorder %s11, 1
      %p28 = por %p26, %p27
      %p29 = scmp.ne.s32.totalorder %s21, %s24
      %p30 = scmp.eq.s32.totalorder %s11, 0
      %p31 = por %p29, %p30
      %p32 = scmp.ne.s32.totalorder %s21, %s24
      %p33 = scmp.eq.s32.totalorder %s16, 1
      %p34 = por %p32, %p33
      %p35 = scmp.ne.s32.totalorder %s24, %s25
      %p36 = scmp.eq.s32.totalorder %s16, 0
      %p37 = por %p35, %p36
      %p38 = scmp.ne.s32.totalorder %s24, %s25
      %p39 = scmp.eq.s32.totalorder %s17, 1
      %p40 = por %p38, %p39
      %p42 = scmp.ne.s32.totalorder %s25, %s41
      %p43 = scmp.eq.s32.totalorder %s17, 0
      %p44 = por %p42, %p43
      %s45 = ssub.s32 %s11, %s18
      %p46 = scmp.eq.s32.totalorder %s45, 0
      %s48 = sadd.s32 %s47, 1
      %s49 = scalar_select %p46, %s47, %s48
      %p52 = pneg %p46
      %p53 = scmp.eq.s32.totalorder %s11, 1
      %p54 = por %p52, %p53
      %p55 = scmp.ne.s32.totalorder %s47, %s50
      %p56 = scmp.eq.s32.totalorder %s11, 0
      %p57 = por %p55, %p56
      %p58 = scmp.ne.s32.totalorder %s47, %s50
      %p59 = scmp.eq.s32.totalorder %s16, 1
      %p60 = por %p58, %p59
      %p61 = scmp.ne.s32.totalorder %s50, %s51
      %p62 = scmp.eq.s32.totalorder %s16, 0
      %p63 = por %p61, %p62
      %p64 = scmp.ne.s32.totalorder %s50, %s51
      %p65 = scmp.eq.s32.totalorder %s17, 1
      %p66 = por %p64, %p65
      %p68 = scmp.ne.s32.totalorder %s51, %s67
      %p69 = scmp.eq.s32.totalorder %s17, 0
      %p70 = por %p68, %p69
      %s72 = sadd.s32 %s71, 1
      %p75 = scmp.eq.s32.totalorder %s11, 1
      %p76 = scmp.ne.s32.totalorder %s71, %s73
      %p77 = scmp.eq.s32.totalorder %s11, 0
      %p78 = por %p76, %p77
      %p79 = scmp.ne.s32.totalorder %s71, %s73
      %p80 = scmp.eq.s32.totalorder %s16, 1
      %p81 = por %p79, %p80
      %p82 = scmp.ne.s32.totalorder %s73, %s74
      %p83 = scmp.eq.s32.totalorder %s16, 0
      %p84 = por %p82, %p83
      %p85 = scmp.ne.s32.totalorder %s73, %s74
      %p86 = scmp.eq.s32.totalorder %s17, 1
      %p87 = por %p85, %p86
      %p89 = scmp.ne.s32.totalorder %s74, %s88
      %p90 = scmp.eq.s32.totalorder %s17, 0
      %p91 = por %p89, %p90
      %s93 = sadd.s32 %s92, 1
      %p96 = scmp.eq.s32.totalorder %s11, 1
      %p97 = scmp.ne.s32.totalorder %s92, %s94
      %p98 = scmp.eq.s32.totalorder %s11, 0
      %p99 = por %p97, %p98
      %p100 = scmp.ne.s32.totalorder %s92, %s94
      %p101 = scmp.eq.s32.totalorder %s16, 1
      %p102 = por %p100, %p101
      %p103 = scmp.ne.s32.totalorder %s94, %s95
      %p104 = scmp.eq.s32.totalorder %s16, 0
      %p105 = por %p103, %p104
      %p106 = scmp.ne.s32.totalorder %s94, %s95
      %p107 = scmp.eq.s32.totalorder %s17, 1
      %p108 = por %p106, %p107
      %p110 = scmp.ne.s32.totalorder %s95, %s109
      %p111 = scmp.eq.s32.totalorder %s17, 0
      %p112 = por %p110, %p111
      %s114 = sadd.s32 %s113, 1
      %p117 = scmp.eq.s32.totalorder %s11, 1
      %p118 = scmp.ne.s32.totalorder %s113, %s115
      %p119 = scmp.eq.s32.totalorder %s11, 0
      %p120 = por %p118, %p119
      %p121 = scmp.ne.s32.totalorder %s113, %s115
      %p122 = scmp.eq.s32.totalorder %s16, 1
      %p123 = por %p121, %p122
      %p124 = scmp.ne.s32.totalorder %s115, %s116
      %p125 = scmp.eq.s32.totalorder %s16, 0
      %p126 = por %p124, %p125
      %p127 = scmp.ne.s32.totalorder %s115, %s116
      %p128 = scmp.eq.s32.totalorder %s17, 1
      %p129 = por %p127, %p128
      %p131 = scmp.ne.s32.totalorder %s116, %s130
      %p132 = scmp.eq.s32.totalorder %s17, 0
      %p133 = por %p131, %p132
      %s134 = ssub.s32 %s11, %s18
      %p135 = scmp.eq.s32.totalorder %s134, 0
      %s137 = sadd.s32 %s136, 1
      %s138 = scalar_select %p135, %s136, %s137
      %p141 = pneg %p135
      %p142 = scmp.eq.s32.totalorder %s11, 1
      %p143 = por %p141, %p142
      %p144 = scmp.ne.s32.totalorder %s136, %s139
      %p145 = scmp.eq.s32.totalorder %s11, 0
      %p146 = por %p144, %p145
      %p147 = scmp.ne.s32.totalorder %s136, %s139
      %p148 = scmp.eq.s32.totalorder %s16, 1
      %p149 = por %p147, %p148
      %p150 = scmp.ne.s32.totalorder %s139, %s140
      %p151 = scmp.eq.s32.totalorder %s16, 0
      %p152 = por %p150, %p151
      %p153 = scmp.ne.s32.totalorder %s139, %s140
      %p154 = scmp.eq.s32.totalorder %s17, 1
      %p155 = por %p153, %p154
      %p157 = scmp.ne.s32.totalorder %s140, %s156
      %p158 = scmp.eq.s32.totalorder %s17, 0
      %p159 = por %p157, %p158
      %p160 = scmp.le.s32.totalorder 1, %s11
      %p161 = scmp.lt.s32.totalorder %s11, 3
      %p162 = pnand %p160, %p161
      %p163 = pneg %p162
      // Predicated region
      $region9: #{upconv_forward.1} parent=5 // pred_check
        _
      $region10: #{upconv_forward.1} parent=5 // pred_check_branch
        %165 = sbr.rel (%p162) target = $region12
      $region11: #{upconv_forward.1} parent=5 // pred_region
        %s166 = ssub.s32 %s11, 1
        // Predicated region
        $region13: #{upconv_forward.1} parent=11 // pred_check
          %p167 = pneg %p84
        $region14: #{upconv_forward.1} parent=11 // pred_check_branch
          %169 = sbr.rel (%p167) target = $region16
        $region15: #{upconv_forward.1} parent=11 // pred_region
          _
        $region16: #{upconv_forward.1} parent=11 // pred_fallthru
          _
        // Predicated region
        $region17: #{upconv_forward.1} parent=11 // pred_check
          %p170 = pneg %p105
        $region18: #{upconv_forward.1} parent=11 // pred_check_branch
          %172 = sbr.rel (%p170) target = $region20
        $region19: #{upconv_forward.1} parent=11 // pred_region
          _
        $region20: #{upconv_forward.1} parent=11 // pred_fallthru
          _
        // Predicated region
        $region21: #{upconv_forward.1} parent=11 // pred_check
          %p173 = pneg %p126
        $region22: #{upconv_forward.1} parent=11 // pred_check_branch
          %175 = sbr.rel (%p173) target = $region24
        $region23: #{upconv_forward.1} parent=11 // pred_region
          _
        $region24: #{upconv_forward.1} parent=11 // pred_fallthru
          _
      $region12: #{upconv_forward.1} parent=5 // pred_fallthru
        _
      %p176 = scmp.lt.s32.totalorder %s11, 2
      // Predicated region
      $region25: #{upconv_forward.1} parent=5 // pred_check
        %p177 = pneg %p176
      $region26: #{upconv_forward.1} parent=5 // pred_check_branch
        %179 = sbr.rel (%p177) target = $region28
      $region27: #{upconv_forward.1} parent=5 // pred_region
        // Predicated region
        $region29: #{upconv_forward.1} parent=27 // pred_check
          %p180 = pneg %p31
        $region30: #{upconv_forward.1} parent=27 // pred_check_branch
          %182 = sbr.rel (%p180) target = $region32
        $region31: #{upconv_forward.1} parent=27 // pred_region
          %s183 = sand.u32 %s21, 1
          %s184 = sand.u32 %s21, 1
          %s185 = smul.addr %s184, 40
          %s186 = scalar_lea.vmem [#allocation2], %s185
          %s187 = smul.u32 2, %s11
          %s188 = smul.addr %s187, 4
          %s189 = scalar_lea.vmem %s0, %s188
          // Predicated region
          $region33: #{upconv_forward.1} parent=31 // pred_check
            _
          $region34: #{upconv_forward.1} parent=31 // pred_check_branch
            %191 = sbr.rel (0) target = $region36
          $region35: #{upconv_forward.1} parent=31 // pred_region
            // Predicated region
            $region37: #{upconv_forward.1} parent=35 // pred_check
              _
            $region38: #{upconv_forward.1} parent=35 // pred_check_branch
              %193 = sbr.rel (0) target = $region40
            $region39: #{upconv_forward.1} parent=35 // pred_region
              // Predicated region
              $region52: #{upconv_forward.1} parent=39 // pred_check
                _
              $region53: #{upconv_forward.1} parent=39 // pred_check_branch
                %216 = sbr.rel (0) target = $region55
              $region54: #{upconv_forward.1} parent=39 // pred_region
                loop: start=0, step=1, limit=1
                $region56: #{upconv_forward.1} parent=54 // loop_pre_header
                  _
                $region57: #{upconv_forward.1} parent=54 // loop_header
                  %s218 = sphi 0, %s222
                  %p219 = scmp.ge.s32.totalorder %s218, 1
                  %s223 = sphi %s189, %s189
                  %s224 = sphi %s186, %s186
                $region58: #{upconv_forward.1} parent=54 // loop_header_branch
                  %221 = sbr.rel (%p219) target = $region62
                $region59: #{upconv_forward.1} parent=54 // loop_body
                  %v225 = vld [vmem:[%s223] sm:$0xff]
                  %226 = vst [vmem:[%s224] sm:$0xff] %v225
                  %v227 = vld [vmem:[%s223 + $0x10] sm:$0xff]
                  %228 = vst [vmem:[%s224 + $0x8] sm:$0xff] %v227
                  %v229 = vld [vmem:[%s223 + $0x20] sm:$0xff]
                  %230 = vst [vmem:[%s224 + $0x10] sm:$0xff] %v229
                  %v231 = vld [vmem:[%s223 + $0x30] sm:$0xff]
                  %232 = vst [vmem:[%s224 + $0x18] sm:$0xff] %v231
                  %v233 = vld [vmem:[%s223 + $0x40] sm:$0xff]
                  %234 = vst [vmem:[%s224 + $0x20] sm:$0xff] %v233
                $region60: #{upconv_forward.1} parent=54 // loop_footer
                  %s222 = sadd.s32 1, %s218
                $region61: #{upconv_forward.1} parent=54 // loop_footer_branch
                  %217 = sbr.rel target = $region57
                $region62: #{upconv_forward.1} parent=54 // loop_exit
                  _
              $region55: #{upconv_forward.1} parent=39 // pred_fallthru
                _
              // Predicated region
              $region63: #{upconv_forward.1} parent=39 // pred_check
                _
              $region64: #{upconv_forward.1} parent=39 // pred_check_branch
                %236 = sbr.rel target = $region66
              $region65: #{upconv_forward.1} parent=39 // pred_region
                _
              $region66: #{upconv_forward.1} parent=39 // pred_fallthru
                _
            $region40: #{upconv_forward.1} parent=35 // pred_fallthru
              _
            // Predicated region
            $region41: #{upconv_forward.1} parent=35 // pred_check
              _
            $region42: #{upconv_forward.1} parent=35 // pred_check_branch
              %195 = sbr.rel target = $region44
            $region43: #{upconv_forward.1} parent=35 // pred_region
              loop: start=0, step=1, limit=1
              $region45: #{upconv_forward.1} parent=43 // loop_pre_header
                _
              $region46: #{upconv_forward.1} parent=43 // loop_header
                %s198 = sphi 0, %s202
                %p199 = scmp.ge.s32.totalorder %s198, 1
                %s203 = sphi %s189, %s189
                %s204 = sphi %s186, %s186
              $region47: #{upconv_forward.1} parent=43 // loop_header_branch
                %201 = sbr.rel (%p199) target = $region51
              $region48: #{upconv_forward.1} parent=43 // loop_body
                %v205 = vld [vmem:[%s203] sm:$0xff]
                %206 = vst [vmem:[%s204] sm:$0xff] %v205
                %v207 = vld [vmem:[%s203 + $0x10] sm:$0xff]
                %208 = vst [vmem:[%s204 + $0x8] sm:$0xff] %v207
                %v209 = vld [vmem:[%s203 + $0x20] sm:$0xff]
                %210 = vst [vmem:[%s204 + $0x10] sm:$0xff] %v209
                %v211 = vld [vmem:[%s203 + $0x30] sm:$0xff]
                %212 = vst [vmem:[%s204 + $0x18] sm:$0xff] %v211
                %v213 = vld [vmem:[%s203 + $0x40] sm:$0xff]
                %214 = vst [vmem:[%s204 + $0x20] sm:$0xff] %v213
              $region49: #{upconv_forward.1} parent=43 // loop_footer
                %s202 = sadd.s32 1, %s198
              $region50: #{upconv_forward.1} parent=43 // loop_footer_branch
                %197 = sbr.rel target = $region46
              $region51: #{upconv_forward.1} parent=43 // loop_exit
                _
            $region44: #{upconv_forward.1} parent=35 // pred_fallthru
              _
          $region36: #{upconv_forward.1} parent=31 // pred_fallthru
            _
          %237 = vnop
        $region32: #{upconv_forward.1} parent=27 // pred_fallthru
          _
        // Predicated region
        $region67: #{upconv_forward.1} parent=27 // pred_check
          %p238 = pneg %p57
        $region68: #{upconv_forward.1} parent=27 // pred_check_branch
          %240 = sbr.rel (%p238) target = $region70
        $region69: #{upconv_forward.1} parent=27 // pred_region
          %s241 = sand.u32 %s47, 1
          %s242 = sand.u32 %s47, 1
          %s243 = smul.addr %s242, 64
          %s244 = scalar_lea.vmem [#allocation3], %s243
          %s245 = smul.u32 2, %s11
          %s246 = smul.addr %s245, 8
          %s247 = scalar_lea.vmem %s1, %s246
          // Predicated region
          $region71: #{upconv_forward.1} parent=69 // pred_check
            _
          $region72: #{upconv_forward.1} parent=69 // pred_check_branch
            %249 = sbr.rel (0) target = $region74
          $region73: #{upconv_forward.1} parent=69 // pred_region
            // Predicated region
            $region75: #{upconv_forward.1} parent=73 // pred_check
              _
            $region76: #{upconv_forward.1} parent=73 // pred_check_branch
              %251 = sbr.rel (0) target = $region78
            $region77: #{upconv_forward.1} parent=73 // pred_region
              loop: start=0, step=1, limit=1
              $region79: #{upconv_forward.1} parent=77 // loop_pre_header
                _
              $region80: #{upconv_forward.1} parent=77 // loop_header
                %s253 = sphi 0, %s257
                %p254 = scmp.ge.s32.totalorder %s253, 1
                %s258 = sphi %s247, %s247
                %s259 = sphi %s244, %s244
              $region81: #{upconv_forward.1} parent=77 // loop_header_branch
                %256 = sbr.rel (%p254) target = $region85
              $region82: #{upconv_forward.1} parent=77 // loop_body
                %v260 = vld [vmem:[%s258] sm:$0xff]
                %261 = vst [vmem:[%s259] sm:$0xff] %v260
                %v262 = vld [vmem:[%s258 + $0x8] sm:$0xff]
                %263 = vst [vmem:[%s259 + $0x8] sm:$0xff] %v262
                %v264 = vld [vmem:[%s258 + $0x20] sm:$0xff]
                %265 = vst [vmem:[%s259 + $0x10] sm:$0xff] %v264
                %v266 = vld [vmem:[%s258 + $0x28] sm:$0xff]
                %267 = vst [vmem:[%s259 + $0x18] sm:$0xff] %v266
                %v268 = vld [vmem:[%s258 + $0x40] sm:$0xff]
                %269 = vst [vmem:[%s259 + $0x20] sm:$0xff] %v268
                %v270 = vld [vmem:[%s258 + $0x48] sm:$0xff]
                %271 = vst [vmem:[%s259 + $0x28] sm:$0xff] %v270
                %v272 = vld [vmem:[%s258 + $0x60] sm:$0xff]
                %273 = vst [vmem:[%s259 + $0x30] sm:$0xff] %v272
                %v274 = vld [vmem:[%s258 + $0x68] sm:$0xff]
                %275 = vst [vmem:[%s259 + $0x38] sm:$0xff] %v274
              $region83: #{upconv_forward.1} parent=77 // loop_footer
                %s257 = sadd.s32 1, %s253
              $region84: #{upconv_forward.1} parent=77 // loop_footer_branch
                %252 = sbr.rel target = $region80
              $region85: #{upconv_forward.1} parent=77 // loop_exit
                _
            $region78: #{upconv_forward.1} parent=73 // pred_fallthru
              _
            // Predicated region
            $region86: #{upconv_forward.1} parent=73 // pred_check
              _
            $region87: #{upconv_forward.1} parent=73 // pred_check_branch
              %277 = sbr.rel target = $region89
            $region88: #{upconv_forward.1} parent=73 // pred_region
              _
            $region89: #{upconv_forward.1} parent=73 // pred_fallthru
              _
          $region74: #{upconv_forward.1} parent=69 // pred_fallthru
            _
          %278 = vnop
        $region70: #{upconv_forward.1} parent=27 // pred_fallthru
          _
      $region28: #{upconv_forward.1} parent=5 // pred_fallthru
        _
      %p279 = scmp.le.s32.totalorder 1, %s11
      %p280 = scmp.lt.s32.totalorder %s11, 3
      %p281 = pnand %p279, %p280
      %p282 = pneg %p281
      // Predicated region
      $region90: #{upconv_forward.1} parent=5 // pred_check
        _
      $region91: #{upconv_forward.1} parent=5 // pred_check_branch
        %284 = sbr.rel (%p281) target = $region93
      $region92: #{upconv_forward.1} parent=5 // pred_region
        %s285 = ssub.s32 %s11, 1
        %s286 = sand.u32 %s24, 1
        %s287 = sand.u32 %s24, 1
        %s288 = smul.addr %s287, 40
        %s289 = scalar_lea.vmem [#allocation2], %s288
        // Predicated region
        $region94: #{upconv_forward.1} parent=92 // pred_check
          %p290 = pneg %p37
        $region95: #{upconv_forward.1} parent=92 // pred_check_branch
          %292 = sbr.rel (%p290) target = $region97
        $region96: #{upconv_forward.1} parent=92 // pred_region
          _
        $region97: #{upconv_forward.1} parent=92 // pred_fallthru
          _
        %s293 = sand.u32 %s50, 1
        %s294 = sand.u32 %s50, 1
        %s295 = smul.addr %s294, 64
        %s296 = scalar_lea.vmem [#allocation3], %s295
        // Predicated region
        $region98: #{upconv_forward.1} parent=92 // pred_check
          %p297 = pneg %p63
        $region99: #{upconv_forward.1} parent=92 // pred_check_branch
          %299 = sbr.rel (%p297) target = $region101
        $region100: #{upconv_forward.1} parent=92 // pred_region
          _
        $region101: #{upconv_forward.1} parent=92 // pred_fallthru
          _
        %s300 = sand.u32 %s24, 1
        %s301 = sand.u32 %s24, 1
        %s302 = smul.addr %s301, 40
        %s303 = scalar_lea.vmem [#allocation2], %s302
        %p304 = pneg %p37
        %p305 = pneg %p34
        %s306 = sand.u32 %s50, 1
        %s307 = sand.u32 %s50, 1
        %s308 = smul.addr %s307, 64
        %s309 = scalar_lea.vmem [#allocation3], %s308
        %p310 = pneg %p63
        %p311 = pneg %p60
        %p312 = pneg %p84
        %p313 = pneg %p81
        %p314 = pneg %p105
        %p315 = pneg %p102
        %p316 = pneg %p126
        %p317 = pneg %p123
        %p318 = pneg %p152
        %p319 = pneg %p149
        %s320 = sand.u32 %s139, 1
        %s321 = sand.u32 %s139, 1
        %s322 = smul.addr %s321, 64
        %s323 = scalar_lea.vmem [#allocation4], %s322
        %s324 = smul.u32 2, %s16
        %s325 = smul.u32 2, %s16
        %s326 = smul.u32 2, %s16
        %v328 = vld [vmem:[%s2] sm:$0xf]
        %v329 = vld [vmem:[%s2 + $0x4] sm:$0xf]
        %v330 = vld [vmem:[%s2 + $0x8] sm:$0xf]
        %v331 = vld [vmem:[%s2 + $0xc] sm:$0xf]
        %v332 = vld [vmem:[%s289] sm:$0xff]
        %v333 = vld [vmem:[%s289 + $0x8] sm:$0xff]
        %v334 = vld [vmem:[%s289 + $0x10] sm:$0xff]
        %v335 = vld [vmem:[%s289 + $0x18] sm:$0xff]
        %v336 = vld [vmem:[%s289 + $0x20] sm:$0x33]
        %v337 = vld [vmem:[%s296] sm:$0xff]
        %v338 = vld [vmem:[%s296 + $0x8] sm:$0xff]
        %v339 = vld [vmem:[%s296 + $0x10] sm:$0xff]
        %v340 = vld [vmem:[%s296 + $0x18] sm:$0xff]
        %v341 = vld [vmem:[%s296 + $0x20] sm:$0xff]
        %v342 = vld [vmem:[%s296 + $0x28] sm:$0xff]
        %v343 = vld [vmem:[%s296 + $0x30] sm:$0xff]
        %v344 = vld [vmem:[%s296 + $0x38] sm:$0xff]
        %v349 = vunpack.c.l.b16 %v328
        %v350 = vunpack.c.l.b16 %v329
        %v351 = vunpack.c.l.b16 %v330
        %v352 = vunpack.c.l.b16 %v331
        %v353 = vpack.c.b16 %v350, %v349
        %v354 = vpack.c.b16 %v352, %v351
        %v360 = vunpack.c.l.b16 %v332
        %v361 = vunpack.c.h.b16 %v332
        %v362 = vunpack.c.l.b16 %v333
        %v363 = vunpack.c.h.b16 %v333
        %v364 = vunpack.c.l.b16 %v334
        %v365 = vunpack.c.h.b16 %v334
        %v366 = vunpack.c.l.b16 %v335
        %v367 = vunpack.c.h.b16 %v335
        %v368 = vunpack.c.l.b16 %v336
        %v369 = vunpack.c.h.b16 %v336
        %v370 = vpack.c.b16 %v362, %v360
        %v371 = vpack.c.b16 %v363, %v361
        %v372 = vpack.c.b16 %v366, %v364
        %v373 = vpack.c.b16 %v367, %v365
        %v374 = vpack.c.b16 %v368, %v368
        %v375 = vpack.c.b16 %v369, %v369
        %vm380 = vcmask 293888
        %v382 = vsel %vm380, %v353, 0
        %v385 = vsel %vm380, %v354, 0
        %vm387 = vcmask 1041408
        %v389 = vsel %vm387, %v374, 0
        %v392 = vsel %vm387, %v375, 0
        %394 = vmatprep.subr.bf16.mxu0 %v371
        %395 = vmatpush1.bf16.msra.mxu0 %v370
        %396 = vmatprep.subr.bf16.mxu0 %v373
        %397 = vmatpush1.bf16.msra.mxu0 %v372
        %398 = vmatprep.subr.bf16.mxu0 %v392
        %399 = vmatpush1.bf16.msra.mxu0 %v389
        %400 = vmatprep.subr.bf16.mxu0 0
        %401 = vmatpush1.bf16.msra.mxu0 0
        %402 = vmatprep.subr.bf16.mxu0 0
        %403 = vmatpush1.bf16.msra.mxu0 0
        %404 = vmatprep.subr.bf16.mxu0 0
        %405 = vmatpush1.bf16.msra.mxu0 0
        %406 = vmatprep.subr.bf16.mxu0 0
        %407 = vmatpush1.bf16.msra.mxu0 0
        %408 = vmatprep.subr.bf16.mxu0 0
        %409 = vmatpush1.bf16.msra.mxu0 0
        %410 = vmatprep.subr.bf16.mxu0 0
        %411 = vmatpush1.bf16.msra.mxu0 0
        %412 = vmatprep.subr.bf16.mxu0 0
        %413 = vmatpush1.bf16.msra.mxu0 0
        %414 = vmatprep.subr.bf16.mxu0 0
        %415 = vmatpush1.bf16.msra.mxu0 0
        %416 = vmatprep.subr.bf16.mxu0 0
        %417 = vmatpush1.bf16.msra.mxu0 0
        %418 = vmatprep.subr.bf16.mxu0 0
        %419 = vmatpush1.bf16.msra.mxu0 0
        %420 = vmatprep.subr.bf16.mxu0 0
        %421 = vmatpush1.bf16.msra.mxu0 0
        %422 = vmatprep.subr.bf16.mxu0 0
        %423 = vmatpush1.bf16.msra.mxu0 0
        %424 = vmatprep.subr.bf16.mxu0 0
        %425 = vmatpush1.bf16.msra.mxu0 0
        %426 = vmatprep.mubr.bf16.mxu0 0
        %427 = vmatmul.mubr.bf16.gmra.mrb[0].mxu0 %v382
        %v428 = vpop.f32.mrb[0].mxu0
        %v429 = vadd.f32 %v337, %v428
        %v430 = vpop.f32.mrb[0].mxu0
        %v431 = vadd.f32 %v338, %v430
        %v432 = vpop.f32.mrb[0].mxu0
        %v433 = vadd.f32 %v339, %v432
        %v434 = vpop.f32.mrb[0].mxu0
        %v435 = vadd.f32 %v340, %v434
        %436 = vmatprep.mubr.bf16.mxu0 0
        %437 = vmatmul.mubr.bf16.gmra.mrb[0].mxu0 %v385
        %v438 = vpop.f32.mrb[0].mxu0
        %v439 = vadd.f32 %v341, %v438
        %v440 = vpop.f32.mrb[0].mxu0
        %v441 = vadd.f32 %v342, %v440
        %v442 = vpop.f32.mrb[0].mxu0
        %v443 = vadd.f32 %v343, %v442
        %v444 = vpop.f32.mrb[0].mxu0
        %v445 = vadd.f32 %v344, %v444
        %446 = vdwg.mxu0
        %v447 = vld [vmem:[%s3] sm:$0xff]
        %v448 = vld [vmem:[%s3 + $0x8] sm:$0xff]
        %v449 = vld [vmem:[%s3 + $0x10] sm:$0xff]
        %v450 = vld [vmem:[%s3 + $0x18] sm:$0xff]
        %452 = vset.pattern.permute.xlu0 0
        %453 = vperm.xlu0 %452, %v447
        %v454 = vpop.permute.xlu0 %453
        %457 = vset.pattern.permute.xlu0 0
        %458 = vperm.xlu0 %457, %v448
        %v459 = vpop.permute.xlu0 %458
        %462 = vset.pattern.permute.xlu0 0
        %463 = vperm.xlu0 %462, %v449
        %v464 = vpop.permute.xlu0 %463
        %467 = vset.pattern.permute.xlu0 0
        %468 = vperm.xlu0 %467, %v450
        %v469 = vpop.permute.xlu0 %468
        %v471 = vmul.f32 %v429, %v454
        %v472 = vmul.f32 %v431, %v454
        %v473 = vmul.f32 %v433, %v459
        %v474 = vmul.f32 %v435, %v459
        %v475 = vmul.f32 %v439, %v464
        %v476 = vmul.f32 %v441, %v464
        %v477 = vmul.f32 %v443, %v469
        %v478 = vmul.f32 %v445, %v469
        %v479 = vld [vmem:[%s4] sm:$0xff]
        %v480 = vld [vmem:[%s4 + $0x8] sm:$0xff]
        %v481 = vld [vmem:[%s4 + $0x10] sm:$0xff]
        %v482 = vld [vmem:[%s4 + $0x18] sm:$0xff]
        %484 = vset.pattern.permute.xlu0 0
        %485 = vperm.xlu0 %484, %v479
        %v486 = vpop.permute.xlu0 %485
        %489 = vset.pattern.permute.xlu0 0
        %490 = vperm.xlu0 %489, %v480
        %v491 = vpop.permute.xlu0 %490
        %494 = vset.pattern.permute.xlu0 0
        %495 = vperm.xlu0 %494, %v481
        %v496 = vpop.permute.xlu0 %495
        %499 = vset.pattern.permute.xlu0 0
        %500 = vperm.xlu0 %499, %v482
        %v501 = vpop.permute.xlu0 %500
        %v503 = vadd.f32 %v471, %v486
        %v504 = vadd.f32 %v472, %v486
        %v505 = vadd.f32 %v473, %v491
        %v506 = vadd.f32 %v474, %v491
        %v507 = vadd.f32 %v475, %v496
        %v508 = vadd.f32 %v476, %v496
        %v509 = vadd.f32 %v477, %v501
        %v510 = vadd.f32 %v478, %v501
        %v511 = vmax.f32 %v503, 0.0
        %v512 = vmax.f32 %v504, 0.0
        %v513 = vmax.f32 %v505, 0.0
        %v514 = vmax.f32 %v506, 0.0
        %v515 = vmax.f32 %v507, 0.0
        %v516 = vmax.f32 %v508, 0.0
        %v517 = vmax.f32 %v509, 0.0
        %v518 = vmax.f32 %v510, 0.0
        %519 = vst [vmem:[%s323] sm:$0xff] %v511
        %520 = vst [vmem:[%s323 + $0x8] sm:$0xff] %v512
        %521 = vst [vmem:[%s323 + $0x10] sm:$0xff] %v513
        %522 = vst [vmem:[%s323 + $0x18] sm:$0xff] %v514
        %523 = vst [vmem:[%s323 + $0x20] sm:$0xff] %v515
        %524 = vst [vmem:[%s323 + $0x28] sm:$0xff] %v516
        %525 = vst [vmem:[%s323 + $0x30] sm:$0xff] %v517
        %526 = vst [vmem:[%s323 + $0x38] sm:$0xff] %v518
        %s527 = sand.u32 %s139, 1
        %s528 = sand.u32 %s139, 1
        %s529 = smul.addr %s528, 64
        %s530 = scalar_lea.vmem [#allocation4], %s529
        // Predicated region
        $region102: #{upconv_forward.1} parent=92 // pred_check
          %p531 = pneg %p149
        $region103: #{upconv_forward.1} parent=92 // pred_check_branch
          %533 = sbr.rel (%p531) target = $region105
        $region104: #{upconv_forward.1} parent=92 // pred_region
          %s534 = smul.u32 2, %s16
          %s535 = smul.addr %s534, 8
          %s536 = scalar_lea.vmem %s5, %s535
          // Predicated region
          $region106: #{upconv_forward.1} parent=104 // pred_check
            _
          $region107: #{upconv_forward.1} parent=104 // pred_check_branch
            %538 = sbr.rel (0) target = $region109
          $region108: #{upconv_forward.1} parent=104 // pred_region
            // Predicated region
            $region110: #{upconv_forward.1} parent=108 // pred_check
              _
            $region111: #{upconv_forward.1} parent=108 // pred_check_branch
              %540 = sbr.rel (0) target = $region113
            $region112: #{upconv_forward.1} parent=108 // pred_region
              loop: start=0, step=1, limit=1
              $region114: #{upconv_forward.1} parent=112 // loop_pre_header
                _
              $region115: #{upconv_forward.1} parent=112 // loop_header
                %s542 = sphi 0, %s546
                %p543 = scmp.ge.s32.totalorder %s542, 1
                %s547 = sphi %s530, %s530
                %s548 = sphi %s536, %s536
              $region116: #{upconv_forward.1} parent=112 // loop_header_branch
                %545 = sbr.rel (%p543) target = $region120
              $region117: #{upconv_forward.1} parent=112 // loop_body
                %v549 = vld [vmem:[%s547] sm:$0xff]
                %550 = vst [vmem:[%s548] sm:$0xff] %v549
                %v551 = vld [vmem:[%s547 + $0x8] sm:$0xff]
                %552 = vst [vmem:[%s548 + $0x8] sm:$0xff] %v551
                %v553 = vld [vmem:[%s547 + $0x10] sm:$0xff]
                %554 = vst [vmem:[%s548 + $0x20] sm:$0xff] %v553
                %v555 = vld [vmem:[%s547 + $0x18] sm:$0xff]
                %556 = vst [vmem:[%s548 + $0x28] sm:$0xff] %v555
                %v557 = vld [vmem:[%s547 + $0x20] sm:$0xff]
                %558 = vst [vmem:[%s548 + $0x40] sm:$0xff] %v557
                %v559 = vld [vmem:[%s547 + $0x28] sm:$0xff]
                %560 = vst [vmem:[%s548 + $0x48] sm:$0xff] %v559
                %v561 = vld [vmem:[%s547 + $0x30] sm:$0xff]
                %562 = vst [vmem:[%s548 + $0x60] sm:$0xff] %v561
                %v563 = vld [vmem:[%s547 + $0x38] sm:$0xff]
                %564 = vst [vmem:[%s548 + $0x68] sm:$0xff] %v563
              $region118: #{upconv_forward.1} parent=112 // loop_footer
                %s546 = sadd.s32 1, %s542
              $region119: #{upconv_forward.1} parent=112 // loop_footer_branch
                %541 = sbr.rel target = $region115
              $region120: #{upconv_forward.1} parent=112 // loop_exit
                _
            $region113: #{upconv_forward.1} parent=108 // pred_fallthru
              _
            // Predicated region
            $region121: #{upconv_forward.1} parent=108 // pred_check
              _
            $region122: #{upconv_forward.1} parent=108 // pred_check_branch
              %566 = sbr.rel target = $region124
            $region123: #{upconv_forward.1} parent=108 // pred_region
              _
            $region124: #{upconv_forward.1} parent=108 // pred_fallthru
              _
          $region109: #{upconv_forward.1} parent=104 // pred_fallthru
            _
          %567 = vnop
        $region105: #{upconv_forward.1} parent=92 // pred_fallthru
          _
      $region93: #{upconv_forward.1} parent=5 // pred_fallthru
        _
      %p568 = scmp.le.s32.totalorder 2, %s11
      // Predicated region
      $region125: #{upconv_forward.1} parent=5 // pred_check
        %p569 = pneg %p568
      $region126: #{upconv_forward.1} parent=5 // pred_check_branch
        %571 = sbr.rel (%p569) target = $region128
      $region127: #{upconv_forward.1} parent=5 // pred_region
        %s572 = ssub.s32 %s11, 2
        // Predicated region
        $region129: #{upconv_forward.1} parent=127 // pred_check
          %p573 = pneg %p155
        $region130: #{upconv_forward.1} parent=127 // pred_check_branch
          %575 = sbr.rel (%p573) target = $region132
        $region131: #{upconv_forward.1} parent=127 // pred_region
          %s576 = sand.u32 %s140, 1
          %s577 = sand.u32 %s140, 1
          %s578 = smul.addr %s577, 64
          %s579 = scalar_lea.vmem [#allocation4], %s578
        $region132: #{upconv_forward.1} parent=127 // pred_fallthru
          _
      $region128: #{upconv_forward.1} parent=5 // pred_fallthru
        _
    $region6: #{upconv_forward.1} parent=1 // loop_footer
      %s15 = sadd.s32 1, %s11
    $region7: #{upconv_forward.1} parent=1 // loop_footer_branch
      %10 = sbr.rel target = $region3
    $region8: #{upconv_forward.1} parent=1 // loop_exit
      _

</llo_original>
